<compile_context>
chip_gen: v6e
topology: v6e:2x2x1
jax: 0.10.0
libtpu: 0.0.40
codegen_flags: <defaults>
</compile_context>

<pallas_src>
import jax
import jax.numpy as jnp
import numpy as np
from jax.experimental import pallas as pl
from jax.experimental.pallas import tpu as pltpu


# ----------------------------------------------------------------------------
# Pallas kernel 1: tiled matmul (optionally + bias), bf16 MXU / f32 accumulate
# ----------------------------------------------------------------------------
def _matmul_kernel(x_ref, w_ref, o_ref):
    o_ref[...] = jnp.dot(
        x_ref[...].astype(jnp.bfloat16),
        w_ref[...].astype(jnp.bfloat16),
        preferred_element_type=jnp.float32,
    )


def _matmul_bias_kernel(x_ref, w_ref, b_ref, o_ref):
    acc = jnp.dot(
        x_ref[...].astype(jnp.bfloat16),
        w_ref[...].astype(jnp.bfloat16),
        preferred_element_type=jnp.float32,
    )
    o_ref[...] = acc + b_ref[...]


def matmul(x2d, w, bias=None, tm=128):
    """x2d: (M, K) f32, w: (K, N) f32, bias: (N,) or None -> (M, N) f32."""
    m, k = x2d.shape
    k2, n = w.shape
    assert k == k2
    # Pad M so every grid tile is a full (tm, K) block: keeps the software
    # pipeline (double-buffered DMA) and bounded per-step VMEM on all chips.
    mp = pl.cdiv(m, tm) * tm
    if mp != m:
        x2d = jnp.pad(x2d, ((0, mp - m), (0, 0)))

    in_specs = [
        pl.BlockSpec((tm, k), lambda i: (i, 0)),   # activation tile, streams over M
        pl.BlockSpec((k, n), lambda i: (0, 0)),    # weight: grid-invariant, stays resident
    ]
    args = [x2d, w]
    if bias is not None:
        in_specs.append(pl.BlockSpec((1, n), lambda i: (0, 0)))
        args.append(bias.reshape(1, n))
        kernel = _matmul_bias_kernel
    else:
        kernel = _matmul_kernel

    out = pl.pallas_call(
        kernel,
        out_shape=jax.ShapeDtypeStruct((mp, n), jnp.float32),
        grid=(mp // tm,),
        in_specs=in_specs,
        out_specs=pl.BlockSpec((tm, n), lambda i: (i, 0)),
        compiler_params=pltpu.CompilerParams(
            dimension_semantics=("parallel",)),  # megacore-shardable on v7x
    )(*args)
    return out[:m] if mp != m else out


# ----------------------------------------------------------------------------
# Pallas kernel 2: batched single-axis attention (full softmax over T)
#   q, k, v: (B*heads, T, e)  ->  out: (B*heads, T, e)
# ----------------------------------------------------------------------------
def make_attn_kernel(scale):
    def kernel(q_ref, k_ref, v_ref, o_ref):
        q = q_ref[...]                     # (tb, T, e) f32
        k = k_ref[...]
        v = v_ref[...]
        s = jnp.einsum("bie,bje->bij", q, k,
                       preferred_element_type=jnp.float32) * scale
        s = s - jnp.max(s, axis=-1, keepdims=True)   # numerically-safe softmax
        p = jnp.exp(s)
        p = p / jnp.sum(p, axis=-1, keepdims=True)
        o_ref[...] = jnp.einsum("bij,bje->bie", p, v,
                                preferred_element_type=jnp.float32)
    return kernel


def _pick_batch_tile(n, target=8):
    t = min(n, target)
    while n % t:
        t -= 1
    return t


def attention(q, k, v, scale):
    bh, t, e = q.shape
    tb = _pick_batch_tile(bh, 8)
    spec = pl.BlockSpec((tb, t, e), lambda i: (i, 0, 0))
    return pl.pallas_call(
        make_attn_kernel(scale),
        out_shape=jax.ShapeDtypeStruct((bh, t, e), jnp.float32),
        grid=(bh // tb,),
        in_specs=[spec, spec, spec],
        out_specs=spec,
        compiler_params=pltpu.CompilerParams(
            dimension_semantics=("parallel",)),
    )(q, k, v)


# ----------------------------------------------------------------------------
# SelfAttention forward (one axial direction), Pallas-backed
# ----------------------------------------------------------------------------
def self_attention_forward(xa, p, heads):
    """xa: (Bax, T, D); p has wq (D,dh), wkv (D,2dh), wo (dh,D), bo (D,)."""
    bax, t, d = xa.shape
    dh = p["wq"].shape[1]
    e = dh // heads

    x2d = xa.reshape(bax * t, d)
    # Fused q/k/v projection: one lane-dense (D, 3*dh) matmul.
    wqkv = jnp.concatenate([p["wq"], p["wkv"]], axis=1)
    qkv = matmul(x2d, wqkv)                       # (Bax*T, 3*dh)
    q, k, v = qkv[:, :dh], qkv[:, dh:2 * dh], qkv[:, 2 * dh:]

    def merge_heads(z):  # (Bax*T, dh) -> (Bax*heads, T, e)   (layout plumbing)
        return (z.reshape(bax, t, heads, e)
                 .transpose(0, 2, 1, 3)
                 .reshape(bax * heads, t, e))

    o = attention(merge_heads(q), merge_heads(k), merge_heads(v),
                  scale=float(e) ** -0.5)         # (Bax*heads, T, e)
    o = (o.reshape(bax, heads, t, e)
          .transpose(0, 2, 1, 3)
          .reshape(bax * t, dh))

    out = matmul(o, p["wo"], bias=p["bo"])        # (Bax*T, D)
    return out.reshape(bax, t, d)


# ----------------------------------------------------------------------------
# AxialAttention forward: (B, H, W, D), dim_index=-1, num_dimensions=2,
# sum_axial_out=True
# ----------------------------------------------------------------------------
def axial_attention_forward(x, params, heads):
    b, h, w, d = x.shape
    # Axial attention #0: permutation [0,2,1,3] -> sequence along H
    x_h = jnp.transpose(x, (0, 2, 1, 3)).reshape(b * w, h, d)
    o_h = self_attention_forward(x_h, params[0], heads)
    o_h = jnp.transpose(o_h.reshape(b, w, h, d), (0, 2, 1, 3))
    # Axial attention #1: identity permutation -> sequence along W
    x_w = x.reshape(b * h, w, d)
    o_w = self_attention_forward(x_w, params[1], heads).reshape(b, h, w, d)
    return o_h + o_w


# ----------------------------------------------------------------------------
# Deterministic parameter init (weights stored as (in, out); == torch W.T)
# ----------------------------------------------------------------------------
def init_params(key, dim, heads, dim_heads=None):
    e = dim // heads if dim_heads is None else dim_heads
    dh = e * heads
    ks = jax.random.split(key, 8)
    params = []
    for i in range(2):
        k0, k1, k2, k3 = ks[4 * i:4 * i + 4]
        params.append({
            "wq": 0.1 * jax.random.normal(k0, (dim, dh), jnp.float32),
            "wkv": 0.1 * jax.random.normal(k1, (dim, 2 * dh), jnp.float32),
            "wo": 0.1 * jax.random.normal(k2, (dh, dim), jnp.float32),
            "bo": 0.1 * jax.random.normal(k3, (dim,), jnp.float32),
        })
    return params


# ----------------------------------------------------------------------------
# Pure-JAX reference mirroring the PyTorch forward (for a correctness check)
# ----------------------------------------------------------------------------
def _self_attention_ref(x, p, heads):
    b, t, d = x.shape
    dh = p["wq"].shape[1]
    e = dh // heads
    q = x @ p["wq"]
    kv = x @ p["wkv"]
    k, v = kv[..., :dh], kv[..., dh:]

    def mh(z):
        return z.reshape(b, t, heads, e).transpose(0, 2, 1, 3).reshape(b * heads, t, e)

    q, k, v = mh(q), mh(k), mh(v)
    dots = jnp.einsum("bie,bje->bij", q, k) * (float(e) ** -0.5)
    attn = jax.nn.softmax(dots, axis=-1)
    out = jnp.einsum("bij,bje->bie", attn, v)
    out = out.reshape(b, heads, t, e).transpose(0, 2, 1, 3).reshape(b, t, dh)
    return out @ p["wo"] + p["bo"]


def axial_attention_ref(x, params, heads):
    b, h, w, d = x.shape
    x1 = jnp.transpose(x, (0, 2, 1, 3)).reshape(b * w, h, d)
    o1 = jnp.transpose(_self_attention_ref(x1, params[0], heads).reshape(b, w, h, d),
                       (0, 2, 1, 3))
    x2 = x.reshape(b * h, w, d)
    o2 = _self_attention_ref(x2, params[1], heads).reshape(b, h, w, d)
    return o1 + o2


if __name__ == "__main__":
    key = jax.random.PRNGKey(0)
    kx, kp = jax.random.split(key)

    # Small shapes consistent with the module: (B, H, W, dim), dim_index=-1.
    # dim=32, heads=4 -> dim_heads=8 (dim divisible by heads, as asserted).
    B, H, W, D, HEADS = 2, 16, 16, 32, 4

    x = jax.random.normal(kx, (B, H, W, D), jnp.float32)
    params = init_params(kp, D, HEADS)

    out = axial_attention_forward(x, params, HEADS)
    out = jax.block_until_ready(out)
    assert out.shape == (B, H, W, D), out.shape

    ref = jax.block_until_ready(axial_attention_ref(x, params, HEADS))
    np.testing.assert_allclose(np.asarray(out), np.asarray(ref),
                               atol=2e-2, rtol=2e-2)

    print("KERNEL_OK")
</pallas_src>

<mosaic_0001>
module attributes {stable_mosaic.version = 11 : i64} {
  func.func @_matmul_kernel(%arg0: i32, %arg1: memref<128x32xf32, #tpu.memory_space<vmem>>, %arg2: memref<32x96xf32, #tpu.memory_space<vmem>>, %arg3: memref<128x96xf32, #tpu.memory_space<vmem>>) attributes {dimension_semantics = [#tpu.dimension_semantics<parallel>], iteration_bounds = array<i64: 4>, scalar_prefetch = 0 : i64, scratch_operands = 0 : i64, tpu.core_type = #tpu.core_type<tc>, window_params = [{transform_indices = @transform_0, window_bounds = array<i64: 128, 32>}, {pipeline_mode = #tpu.pipeline_mode<synchronous>, transform_indices = @transform_1, window_bounds = array<i64: 32, 96>}, {transform_indices = @transform_2, window_bounds = array<i64: 128, 96>}]} {
    %c0 = arith.constant 0 : index
    %c0_0 = arith.constant 0 : index
    %0 = vector.load %arg1[%c0, %c0_0] : memref<128x32xf32, #tpu.memory_space<vmem>>, vector<128x32xf32>
    %1 = arith.truncf %0 : vector<128x32xf32> to vector<128x32xbf16>
    %c0_1 = arith.constant 0 : index
    %c0_2 = arith.constant 0 : index
    %2 = vector.load %arg2[%c0_1, %c0_2] : memref<32x96xf32, #tpu.memory_space<vmem>>, vector<32x96xf32>
    %3 = arith.truncf %2 : vector<32x96xf32> to vector<32x96xbf16>
    %cst = arith.constant dense<0.000000e+00> : vector<128x96xf32>
    %4 = tpu.matmul %1, %3, %cst {dimension_numbers = #tpu.dot_dimension_numbers<[1], [0], [0], [1], [0, 0, 1, 1], [], []>} : vector<128x32xbf16>, vector<32x96xbf16>, vector<128x96xf32> -> vector<128x96xf32>
    %c0_3 = arith.constant 0 : index
    %c0_4 = arith.constant 0 : index
    %5 = vector.load %arg3[%c0_3, %c0_4] : memref<128x96xf32, #tpu.memory_space<vmem>>, vector<128x96xf32>
    tpu.vector_store %arg3[%c0_3, %c0_4], %4 {strides = array<i32>} : memref<128x96xf32, #tpu.memory_space<vmem>>, vector<128x96xf32>,
    return
  }
  func.func @transform_0(%arg0: i32) -> (i32, i32) {
    %c0_i32 = arith.constant 0 : i32
    %c0_i32_0 = arith.constant 0 : i32
    return %arg0, %c0_i32 : i32, i32
  }
  func.func @transform_1(%arg0: i32) -> (i32, i32) {
    %c0_i32 = arith.constant 0 : i32
    %c0_i32_0 = arith.constant 0 : i32
    %c0_i32_1 = arith.constant 0 : i32
    return %c0_i32, %c0_i32_0 : i32, i32
  }
  func.func @transform_2(%arg0: i32) -> (i32, i32) {
    %c0_i32 = arith.constant 0 : i32
    %c0_i32_0 = arith.constant 0 : i32
    return %arg0, %c0_i32 : i32, i32
  }
}

</mosaic_0001>

<llo_original>
// kernel: tpu_custom_call.1
$region0: #{tpu_custom_call.1}
  #allocation0 [shape = 'u32[]', space=smem, size = 0x4, offset = 0x4, fixed_abs, tag = 'smem constant byte address 0x4 - core index']
  #allocation1 [shape = 'u32[144,128]{1,0:T(1,128)}', space=vmem, size = 0x12000, scoped, tag = 'internal scratch']
  %s0 = inlined_call_operand.vmem [shape: f32[512,32], index: 0, kind: input, shape index: {}]
  %s1 = inlined_call_operand.vmem [shape: f32[32,96], index: 1, kind: input, shape index: {}]
  %s2 = inlined_call_operand.vmem [shape: f32[512,96], index: 2, kind: output, shape index: {}]
  %s3 = sld [smem:[#allocation0]]
  $region41: #{tpu_custom_call.1} parent=0
    _
  %s5 = ssub.s32 1, %s3
  %s6 = scalar_select 0, %s5, %s3
  loop: start=0, step=1, limit=6
  $region2: #{tpu_custom_call.1} parent=0 // loop_pre_header
    _
  $region3: #{tpu_custom_call.1} parent=0 // loop_header
    %s8 = sphi 0, %s12
    %p9 = scmp.ge.s32.totalorder %s8, 6
    %s18 = sphi 0, %s20
    %s21 = sphi 0, %s18
    %s22 = sphi 0, %s21
    %s38 = sphi 0, %s22
    %s42 = sphi 0, %s42
    %s44 = sphi 0, %s42
    %s45 = sphi 0, %s44
    %s59 = sphi 0, %s45
    %s65 = sphi 0, %s67
    %s68 = sphi 0, %s65
    %s69 = sphi 0, %s68
    %s85 = sphi 0, %s69
  $region4: #{tpu_custom_call.1} parent=0 // loop_header_branch
    %11 = sbr.rel (%p9) target = $region8
  $region5: #{tpu_custom_call.1} parent=0 // loop_body
    %s13 = ssub.s32 %s8, 1
    %s14 = ssub.s32 %s8, 2
    %s15 = sadd.s32 %s8, 1
    %s16 = ssub.s32 %s8, %s15
    %p17 = scmp.eq.s32.totalorder %s16, 0
    %s19 = sadd.s32 %s18, 1
    %s20 = scalar_select %p17, %s18, %s19
    %p23 = pneg %p17
    %p24 = scmp.eq.s32.totalorder %s8, 3
    %p25 = por %p23, %p24
    %p26 = scmp.ne.s32.totalorder %s18, %s21
    %p27 = scmp.eq.s32.totalorder %s8, 0
    %p28 = por %p26, %p27
    %p29 = scmp.ne.s32.totalorder %s18, %s21
    %p30 = scmp.eq.s32.totalorder %s13, 3
    %p31 = por %p29, %p30
    %p32 = scmp.ne.s32.totalorder %s21, %s22
    %p33 = scmp.eq.s32.totalorder %s13, 0
    %p34 = por %p32, %p33
    %p35 = scmp.ne.s32.totalorder %s21, %s22
    %p36 = scmp.eq.s32.totalorder %s14, 3
    %p37 = por %p35, %p36
    %p39 = scmp.ne.s32.totalorder %s22, %s38
    %p40 = scmp.eq.s32.totalorder %s14, 0
    %p41 = por %p39, %p40
    %s43 = sadd.s32 %s42, 1
    %p46 = scmp.eq.s32.totalorder %s8, 3
    %p47 = scmp.ne.s32.totalorder %s42, %s44
    %p48 = scmp.eq.s32.totalorder %s8, 0
    %p49 = por %p47, %p48
    %p50 = scmp.ne.s32.totalorder %s42, %s44
    %p51 = scmp.eq.s32.totalorder %s13, 3
    %p52 = por %p50, %p51
    %p53 = scmp.ne.s32.totalorder %s44, %s45
    %p54 = scmp.eq.s32.totalorder %s13, 0
    %p55 = por %p53, %p54
    %p56 = scmp.ne.s32.totalorder %s44, %s45
    %p57 = scmp.eq.s32.totalorder %s14, 3
    %p58 = por %p56, %p57
    %p60 = scmp.ne.s32.totalorder %s45, %s59
    %p61 = scmp.eq.s32.totalorder %s14, 0
    %p62 = por %p60, %p61
    %s63 = ssub.s32 %s8, %s15
    %p64 = scmp.eq.s32.totalorder %s63, 0
    %s66 = sadd.s32 %s65, 1
    %s67 = scalar_select %p64, %s65, %s66
    %p70 = pneg %p64
    %p71 = scmp.eq.s32.totalorder %s8, 3
    %p72 = por %p70, %p71
    %p73 = scmp.ne.s32.totalorder %s65, %s68
    %p74 = scmp.eq.s32.totalorder %s8, 0
    %p75 = por %p73, %p74
    %p76 = scmp.ne.s32.totalorder %s65, %s68
    %p77 = scmp.eq.s32.totalorder %s13, 3
    %p78 = por %p76, %p77
    %p79 = scmp.ne.s32.totalorder %s68, %s69
    %p80 = scmp.eq.s32.totalorder %s13, 0
    %p81 = por %p79, %p80
    %p82 = scmp.ne.s32.totalorder %s68, %s69
    %p83 = scmp.eq.s32.totalorder %s14, 3
    %p84 = por %p82, %p83
    %p86 = scmp.ne.s32.totalorder %s69, %s85
    %p87 = scmp.eq.s32.totalorder %s14, 0
    %p88 = por %p86, %p87
    %p89 = scmp.le.s32.totalorder 1, %s8
    %p90 = scmp.lt.s32.totalorder %s8, 5
    %p91 = pnand %p89, %p90
    %p92 = pneg %p91
    // Predicated region
    $region9: #{tpu_custom_call.1} parent=5 // pred_check
      _
    $region10: #{tpu_custom_call.1} parent=5 // pred_check_branch
      %94 = sbr.rel (%p91) target = $region12
    $region11: #{tpu_custom_call.1} parent=5 // pred_region
      %s95 = ssub.s32 %s8, 1
      // Predicated region
      $region13: #{tpu_custom_call.1} parent=11 // pred_check
        %p96 = pneg %p55
      $region14: #{tpu_custom_call.1} parent=11 // pred_check_branch
        %98 = sbr.rel (%p96) target = $region16
      $region15: #{tpu_custom_call.1} parent=11 // pred_region
        _
      $region16: #{tpu_custom_call.1} parent=11 // pred_fallthru
        _
    $region12: #{tpu_custom_call.1} parent=5 // pred_fallthru
      _
    %p99 = scmp.lt.s32.totalorder %s8, 4
    // Predicated region
    $region17: #{tpu_custom_call.1} parent=5 // pred_check
      %p100 = pneg %p99
    $region18: #{tpu_custom_call.1} parent=5 // pred_check_branch
      %102 = sbr.rel (%p100) target = $region20
    $region19: #{tpu_custom_call.1} parent=5 // pred_region
      // Predicated region
      $region21: #{tpu_custom_call.1} parent=19 // pred_check
        %p103 = pneg %p28
      $region22: #{tpu_custom_call.1} parent=19 // pred_check_branch
        %105 = sbr.rel (%p103) target = $region24
      $region23: #{tpu_custom_call.1} parent=19 // pred_region
        %s106 = smul.u32 16, %s8
        %p107 = scmp.lt.s32.totalorder %s106, 63
        %s108 = scalar_select %p107, %s106, 63
        %s109 = smul.addr %s108, 8
        %s110 = scalar_lea.vmem %s0, %s109
        %s111 = smul.u32 16, %s8
      $region24: #{tpu_custom_call.1} parent=19 // pred_fallthru
        _
    $region20: #{tpu_custom_call.1} parent=5 // pred_fallthru
      _
    %p112 = scmp.le.s32.totalorder 1, %s8
    %p113 = scmp.lt.s32.totalorder %s8, 5
    %p114 = pnand %p112, %p113
    %p115 = pneg %p114
    // Predicated region
    $region25: #{tpu_custom_call.1} parent=5 // pred_check
      _
    $region26: #{tpu_custom_call.1} parent=5 // pred_check_branch
      %117 = sbr.rel (%p114) target = $region28
    $region27: #{tpu_custom_call.1} parent=5 // pred_region
      %s118 = ssub.s32 %s8, 1
      %s119 = smul.u32 16, %s13
      %p120 = scmp.lt.s32.totalorder %s119, 63
      %s121 = scalar_select %p120, %s119, 63
      %s122 = smul.addr %s121, 8
      %s123 = scalar_lea.vmem %s0, %s122
      %p124 = pneg %p34
      %p125 = pneg %p31
      %p126 = pneg %p55
      %p127 = pneg %p52
      %p128 = pneg %p81
      %p129 = pneg %p78
      %s130 = smul.u32 16, %s13
      %p131 = scmp.lt.s32.totalorder %s130, 63
      %s132 = scalar_select %p131, %s130, 63
      %s133 = smul.addr %s132, 8
      %s134 = scalar_lea.vmem %s2, %s133
      %s135 = smul.u32 16, %s13
      %p136 = scmp.lt.s32.totalorder %s135, 63
      %s137 = scalar_select %p136, %s135, 63
      %s138 = smul.addr %s137, 8
      %s139 = scalar_lea.vmem %s0, %s138
      %s140 = smul.u32 16, %s13
      %s141 = smul.u32 16, %s13
      %p142 = scmp.lt.s32.totalorder %s141, 63
      %s143 = scalar_select %p142, %s141, 63
      %s144 = smul.addr %s143, 8
      %s145 = scalar_lea.vmem %s2, %s144
      %s146 = smul.u32 16, %s13
      %v148 = vld [vmem:[%s139] sm:$0xff]
      %v149 = vld [vmem:[%s139 + $0x8] sm:$0xff]
      %v150 = vld [vmem:[%s139 + $0x10] sm:$0xff]
      %v151 = vld [vmem:[%s139 + $0x18] sm:$0xff]
      %v152 = vld [vmem:[%s139 + $0x20] sm:$0xff]
      %v153 = vld [vmem:[%s139 + $0x28] sm:$0xff]
      %v154 = vld [vmem:[%s139 + $0x30] sm:$0xff]
      %v155 = vld [vmem:[%s139 + $0x38] sm:$0xff]
      %v156 = vld [vmem:[%s139 + $0x40] sm:$0xff]
      %v157 = vld [vmem:[%s139 + $0x48] sm:$0xff]
      %v158 = vld [vmem:[%s139 + $0x50] sm:$0xff]
      %v159 = vld [vmem:[%s139 + $0x58] sm:$0xff]
      %v160 = vld [vmem:[%s139 + $0x60] sm:$0xff]
      %v161 = vld [vmem:[%s139 + $0x68] sm:$0xff]
      %v162 = vld [vmem:[%s139 + $0x70] sm:$0xff]
      %v163 = vld [vmem:[%s139 + $0x78] sm:$0xff]
      %v164 = vpack.c.bf16 %v149, %v148
      %v165 = vpack.c.bf16 %v151, %v150
      %v166 = vpack.c.bf16 %v153, %v152
      %v167 = vpack.c.bf16 %v155, %v154
      %v168 = vpack.c.bf16 %v157, %v156
      %v169 = vpack.c.bf16 %v159, %v158
      %v170 = vpack.c.bf16 %v161, %v160
      %v171 = vpack.c.bf16 %v163, %v162
      %v172 = vld [vmem:[%s1] sm:$0xff]
      %v173 = vld [vmem:[%s1 + $0x8] sm:$0xff]
      %v174 = vld [vmem:[%s1 + $0x10] sm:$0xff]
      %v175 = vld [vmem:[%s1 + $0x18] sm:$0xff]
      %v176 = vpack.c.bf16 %v173, %v172
      %v177 = vpack.c.bf16 %v175, %v174
      %vm178 = vcmask 261120
      %v180 = vsel %vm178, %v164, 0
      %v183 = vsel %vm178, %v165, 0
      %v186 = vsel %vm178, %v166, 0
      %v189 = vsel %vm178, %v167, 0
      %v192 = vsel %vm178, %v168, 0
      %v195 = vsel %vm178, %v169, 0
      %v198 = vsel %vm178, %v170, 0
      %v201 = vsel %vm178, %v171, 0
      %203 = vmatprep.subr.bf16.mxu0 0
      %204 = vmatpush1.bf16.msra.mxu0 0
      %205 = vmatprep.subr.bf16.mxu0 0
      %206 = vmatpush1.bf16.msra.mxu0 0
      %207 = vmatprep.subr.bf16.mxu0 0
      %208 = vmatpush1.bf16.msra.mxu0 0
      %209 = vmatprep.subr.bf16.mxu0 0
      %210 = vmatpush1.bf16.msra.mxu0 0
      %211 = vmatprep.subr.bf16.mxu0 0
      %212 = vmatpush1.bf16.msra.mxu0 0
      %213 = vmatprep.subr.bf16.mxu0 0
      %214 = vmatpush1.bf16.msra.mxu0 0
      %215 = vmatprep.subr.bf16.mxu0 0
      %216 = vmatpush1.bf16.msra.mxu0 %v177
      %217 = vmatprep.subr.bf16.mxu0 0
      %218 = vmatpush1.bf16.msra.mxu0 %v176
      %219 = vmatprep.subr.bf16.mxu0 0
      %220 = vmatpush2.bf16.msra.mxu0 0
      %221 = vmatprep.subr.bf16.mxu0 0
      %222 = vmatpush2.bf16.msra.mxu0 0
      %223 = vmatprep.subr.bf16.mxu0 0
      %224 = vmatpush2.bf16.msra.mxu0 0
      %225 = vmatprep.subr.bf16.mxu0 0
      %226 = vmatpush2.bf16.msra.mxu0 0
      %227 = vmatprep.subr.bf16.mxu0 0
      %228 = vmatpush2.bf16.msra.mxu0 0
      %229 = vmatprep.subr.bf16.mxu0 0
      %230 = vmatpush2.bf16.msra.mxu0 0
      %231 = vmatprep.subr.bf16.mxu0 0
      %232 = vmatpush2.bf16.msra.mxu0 0
      %233 = vmatprep.subr.bf16.mxu0 0
      %234 = vmatpush2.bf16.msra.mxu0 0
      %235 = vmatprep.mubr.bf16.mxu0 0
      %236 = vmatmul.mubr.bf16.gmra.mxu0 %v180
      %v237 = vpop.f32.mrf.mxu0
      %v238 = vadd.f32 0.0, %v237
      %v239 = vpop.f32.mrf.mxu0
      %v240 = vpop.f32.mrf.mxu0
      %v241 = vadd.f32 0.0, %v240
      %v242 = vpop.f32.mrf.mxu0
      %243 = vmatprep.mubr.bf16.mxu0 0
      %244 = vmatmul.mubr.bf16.gmra.mxu0 %v183
      %v245 = vpop.f32.mrf.mxu0
      %v246 = vadd.f32 0.0, %v245
      %v247 = vpop.f32.mrf.mxu0
      %v248 = vpop.f32.mrf.mxu0
      %v249 = vadd.f32 0.0, %v248
      %v250 = vpop.f32.mrf.mxu0
      %251 = vmatprep.mubr.bf16.mxu0 0
      %252 = vmatmul.mubr.bf16.gmra.mxu0 %v186
      %v253 = vpop.f32.mrf.mxu0
      %v254 = vadd.f32 0.0, %v253
      %v255 = vpop.f32.mrf.mxu0
      %v256 = vpop.f32.mrf.mxu0
      %v257 = vadd.f32 0.0, %v256
      %v258 = vpop.f32.mrf.mxu0
      %259 = vmatprep.mubr.bf16.mxu0 0
      %260 = vmatmul.mubr.bf16.gmra.mxu0 %v189
      %v261 = vpop.f32.mrf.mxu0
      %v262 = vadd.f32 0.0, %v261
      %v263 = vpop.f32.mrf.mxu0
      %v264 = vpop.f32.mrf.mxu0
      %v265 = vadd.f32 0.0, %v264
      %v266 = vpop.f32.mrf.mxu0
      %267 = vmatprep.mubr.bf16.mxu0 0
      %268 = vmatmul.mubr.bf16.gmra.mxu0 %v192
      %v269 = vpop.f32.mrf.mxu0
      %v270 = vadd.f32 0.0, %v269
      %v271 = vpop.f32.mrf.mxu0
      %v272 = vpop.f32.mrf.mxu0
      %v273 = vadd.f32 0.0, %v272
      %v274 = vpop.f32.mrf.mxu0
      %275 = vmatprep.mubr.bf16.mxu0 0
      %276 = vmatmul.mubr.bf16.gmra.mxu0 %v195
      %v277 = vpop.f32.mrf.mxu0
      %v278 = vadd.f32 0.0, %v277
      %v279 = vpop.f32.mrf.mxu0
      %v280 = vpop.f32.mrf.mxu0
      %v281 = vadd.f32 0.0, %v280
      %v282 = vpop.f32.mrf.mxu0
      %283 = vmatprep.mubr.bf16.mxu0 0
      %284 = vmatmul.mubr.bf16.gmra.mxu0 %v198
      %v285 = vpop.f32.mrf.mxu0
      %v286 = vadd.f32 0.0, %v285
      %v287 = vpop.f32.mrf.mxu0
      %v288 = vpop.f32.mrf.mxu0
      %v289 = vadd.f32 0.0, %v288
      %v290 = vpop.f32.mrf.mxu0
      %291 = vmatprep.mubr.bf16.mxu0 0
      %292 = vmatmul.mubr.bf16.gmra.mxu0 %v201
      %v293 = vpop.f32.mrf.mxu0
      %v294 = vadd.f32 0.0, %v293
      %v295 = vpop.f32.mrf.mxu0
      %v296 = vpop.f32.mrf.mxu0
      %v297 = vadd.f32 0.0, %v296
      %v298 = vpop.f32.mrf.mxu0
      %299 = vdwg.mxu0
      %vm300 = vcmask 785408
      %301 = vst.msk [vmem:[%s145] sm:$0xff] %vm300, %v238
      %302 = vst.msk [vmem:[%s145 + $0x8] sm:$0xff] %vm300, %v241
      %303 = vst.msk [vmem:[%s145 + $0x10] sm:$0xff] %vm300, %v246
      %304 = vst.msk [vmem:[%s145 + $0x18] sm:$0xff] %vm300, %v249
      %305 = vst.msk [vmem:[%s145 + $0x20] sm:$0xff] %vm300, %v254
      %306 = vst.msk [vmem:[%s145 + $0x28] sm:$0xff] %vm300, %v257
      %307 = vst.msk [vmem:[%s145 + $0x30] sm:$0xff] %vm300, %v262
      %308 = vst.msk [vmem:[%s145 + $0x38] sm:$0xff] %vm300, %v265
      %309 = vst.msk [vmem:[%s145 + $0x40] sm:$0xff] %vm300, %v270
      %310 = vst.msk [vmem:[%s145 + $0x48] sm:$0xff] %vm300, %v273
      %311 = vst.msk [vmem:[%s145 + $0x50] sm:$0xff] %vm300, %v278
      %312 = vst.msk [vmem:[%s145 + $0x58] sm:$0xff] %vm300, %v281
      %313 = vst.msk [vmem:[%s145 + $0x60] sm:$0xff] %vm300, %v286
      %314 = vst.msk [vmem:[%s145 + $0x68] sm:$0xff] %vm300, %v289
      %315 = vst.msk [vmem:[%s145 + $0x70] sm:$0xff] %vm300, %v294
      %316 = vst.msk [vmem:[%s145 + $0x78] sm:$0xff] %vm300, %v297
      %s317 = smul.u32 16, %s13
      %p318 = scmp.lt.s32.totalorder %s317, 63
      %s319 = scalar_select %p318, %s317, 63
      %s320 = smul.addr %s319, 8
      %s321 = scalar_lea.vmem %s2, %s320
      // Predicated region
      $region29: #{tpu_custom_call.1} parent=27 // pred_check
        %p322 = pneg %p78
      $region30: #{tpu_custom_call.1} parent=27 // pred_check_branch
        %324 = sbr.rel (%p322) target = $region32
      $region31: #{tpu_custom_call.1} parent=27 // pred_region
        %s325 = smul.u32 16, %s13
      $region32: #{tpu_custom_call.1} parent=27 // pred_fallthru
        _
    $region28: #{tpu_custom_call.1} parent=5 // pred_fallthru
      _
    %p326 = scmp.le.s32.totalorder 2, %s8
    // Predicated region
    $region33: #{tpu_custom_call.1} parent=5 // pred_check
      %p327 = pneg %p326
    $region34: #{tpu_custom_call.1} parent=5 // pred_check_branch
      %329 = sbr.rel (%p327) target = $region36
    $region35: #{tpu_custom_call.1} parent=5 // pred_region
      %s330 = ssub.s32 %s8, 2
      // Predicated region
      $region37: #{tpu_custom_call.1} parent=35 // pred_check
        %p331 = pneg %p84
      $region38: #{tpu_custom_call.1} parent=35 // pred_check_branch
        %333 = sbr.rel (%p331) target = $region40
      $region39: #{tpu_custom_call.1} parent=35 // pred_region
        %s334 = smul.u32 16, %s14
        %p335 = scmp.lt.s32.totalorder %s334, 63
        %s336 = scalar_select %p335, %s334, 63
        %s337 = smul.addr %s336, 8
        %s338 = scalar_lea.vmem %s2, %s337
      $region40: #{tpu_custom_call.1} parent=35 // pred_fallthru
        _
    $region36: #{tpu_custom_call.1} parent=5 // pred_fallthru
      _
  $region6: #{tpu_custom_call.1} parent=0 // loop_footer
    %s12 = sadd.s32 1, %s8
  $region7: #{tpu_custom_call.1} parent=0 // loop_footer_branch
    %7 = sbr.rel target = $region3
  $region8: #{tpu_custom_call.1} parent=0 // loop_exit
    _

</llo_original>
